<compile_context>
chip_gen: v7x
topology: tpu7x:2x2x1
jax: 0.10.0
libtpu: 0.0.40
codegen_flags: <defaults>
</compile_context>

<pallas_src>
import functools

import jax
import jax.numpy as jnp
from jax.experimental import pallas as pl
from jax.experimental.pallas import tpu as pltpu


def _focal_modulator(pt, gamma):
    """(1 - pt) ** gamma without the generic pow path when gamma is an int."""
    one_minus = 1.0 - pt
    if isinstance(gamma, int):
        if gamma == 0:
            return jnp.ones_like(pt)
        if gamma == 2:
            return jnp.square(one_minus)          # one VPU multiply
        return one_minus ** gamma                 # lax.integer_pow -> mul chain
    return jnp.power(one_minus, jnp.float32(gamma))  # EUP exp/log path


def _focal_tile(pred_ref, target_ref, alpha_ref, gamma):
    """Per-sample focal loss for one (C, TILE_N) lane-dense tile -> (1, TILE_N)."""
    pred = pred_ref[...].astype(jnp.float32)      # (C, T) upcast in-register
    tgt = target_ref[...]                         # (1, T) int32 (-1 = padding)
    alpha = alpha_ref[...]                        # (C, 1) f32

    # log_softmax along the class (sublane) axis.
    m = jnp.max(pred, axis=0, keepdims=True)
    z = pred - m
    lse = jnp.log(jnp.sum(jnp.exp(z), axis=0, keepdims=True))
    log_sm = z - lse                              # (C, T)

    # Pick the target row per column: predicate + select (no float one-hot,
    # no dynamic gather).
    cls = jax.lax.broadcasted_iota(jnp.int32, pred.shape, 0)       # (C, T)
    is_tgt = cls == tgt                                            # (C, T) bool

    logpt = jnp.sum(jnp.where(is_tgt, log_sm, 0.0), axis=0, keepdims=True)   # (1, T)
    alpha_t = jnp.sum(jnp.where(is_tgt, alpha, 0.0), axis=0, keepdims=True)  # (1, T)

    ce = -logpt
    pt = jnp.exp(logpt)
    mod = _focal_modulator(pt, gamma)

    # Padded columns (tgt == -1): logpt=0, alpha_t=0, pt=1 -> contribution 0.
    return alpha_t * mod * ce                     # (1, T)


def _focal_loss_sum_kernel(pred_ref, target_ref, alpha_ref, out_ref, acc_ref, *, gamma):
    """Reduction kernel: accumulates a lane-dense partial sum across the grid."""
    i = pl.program_id(0)

    @pl.when(i == 0)
    def _init():
        acc_ref[...] = jnp.zeros_like(acc_ref)

    acc_ref[...] += _focal_tile(pred_ref, target_ref, alpha_ref, gamma)

    @pl.when(i == pl.num_programs(0) - 1)
    def _finalize():
        out_ref[0] = jnp.sum(acc_ref[...])        # single cross-lane reduce


def _focal_loss_persample_kernel(pred_ref, target_ref, alpha_ref, out_ref, *, gamma):
    """reduction='none' kernel: each grid step writes its own (1, TILE_N) block."""
    out_ref[...] = _focal_tile(pred_ref, target_ref, alpha_ref, gamma)


def multiclass_focal_loss(pred, target, alpha, gamma=2, reduction="mean", tile_n=512):
    """pred: (N, C) float32/bf16 logits, target: (N,) int class ids, alpha: (C,) weights."""
    N, C = pred.shape
    assert tile_n % 128 == 0, "tile_n must be a multiple of 128 (lane width)"
    if pred.dtype not in (jnp.float32, jnp.bfloat16):
        pred = pred.astype(jnp.float32)   # keep bf16 as bf16 (half the HBM traffic)

    n_pad = pl.cdiv(N, tile_n) * tile_n
    pad = n_pad - N

    # Lane-dense layout: N on lanes, C on sublanes (one XLA transpose in HBM).
    pred_t = jnp.pad(pred.T, ((0, 0), (0, pad)))                         # (C, n_pad)
    tgt = jnp.pad(target.reshape(1, N).astype(jnp.int32),
                  ((0, 0), (0, pad)), constant_values=-1)                # (1, n_pad)
    alpha2d = jnp.asarray(alpha).reshape(C, 1).astype(jnp.float32)       # (C, 1)

    grid = (n_pad // tile_n,)
    in_specs = [
        pl.BlockSpec((C, tile_n), lambda i: (0, i)),
        pl.BlockSpec((1, tile_n), lambda i: (0, i)),
        pl.BlockSpec((C, 1), lambda i: (0, 0)),
    ]
    cost = pl.CostEstimate(
        flops=int(12 * N * C),
        transcendentals=int(N * C + 2 * N),
        bytes_accessed=int(n_pad * C * pred_t.dtype.itemsize + n_pad * 4 + C * 4
                           + (n_pad * 4 if reduction == "none" else 4)),
    )

    if reduction == "none":
        # Independent tiles -> fully parallel grid (megacore-friendly),
        # lane-dense (1, n_pad) output slab (unmasked 128-wide stores).
        out = pl.pallas_call(
            functools.partial(_focal_loss_persample_kernel, gamma=gamma),
            out_shape=jax.ShapeDtypeStruct((1, n_pad), jnp.float32),
            grid=grid,
            in_specs=in_specs,
            out_specs=pl.BlockSpec((1, tile_n), lambda i: (0, i)),
            compiler_params=pltpu.CompilerParams(
                dimension_semantics=("parallel",),
                vmem_limit_bytes=32 * 1024 * 1024,
            ),
            cost_estimate=cost,
        )(pred_t, tgt, alpha2d)
        return out[0, :N]

    if reduction not in ("mean", "sum"):
        raise ValueError(f"unknown reduction: {reduction!r}")

    # TODO(synk): on v7x (2 TensorCores) split N over a leading "parallel" axis
    # with per-core partial sums combined in the wrapper.
    total = pl.pallas_call(
        functools.partial(_focal_loss_sum_kernel, gamma=gamma),
        out_shape=jax.ShapeDtypeStruct((1,), jnp.float32),
        grid=grid,
        in_specs=in_specs,
        out_specs=pl.BlockSpec(memory_space=pltpu.MemorySpace.SMEM),
        scratch_shapes=[pltpu.VMEM((1, tile_n), jnp.float32)],
        compiler_params=pltpu.CompilerParams(
            dimension_semantics=("arbitrary",),
            vmem_limit_bytes=32 * 1024 * 1024,
        ),
        cost_estimate=cost,
    )(pred_t, tgt, alpha2d)

    loss_sum = total[0]
    if reduction == "mean":
        return loss_sum / N
    return loss_sum


def reference_focal_loss(pred, target, alpha, gamma=2, reduction="mean"):
    log_sm = jax.nn.log_softmax(pred.astype(jnp.float32), axis=1)
    logpt = jnp.take_along_axis(log_sm, target.reshape(-1, 1), axis=1).reshape(-1)
    ce = -logpt
    pt = jnp.exp(logpt)
    a = jnp.asarray(alpha)[target]
    fl = a * (1.0 - pt) ** gamma * ce
    if reduction == "mean":
        return jnp.mean(fl)
    if reduction == "sum":
        return jnp.sum(fl)
    return fl


if __name__ == "__main__":
    key = jax.random.PRNGKey(0)
    k1, k2 = jax.random.split(key)

    # 3-class problem per the module docstring (alpha = [0.2, 0.3, 0.5]).
    N, C = 300, 3
    pred = jax.random.normal(k1, (N, C), dtype=jnp.float32)
    target = jax.random.randint(k2, (N,), 0, C, dtype=jnp.int32)
    alpha = jnp.array([0.2, 0.3, 0.5], dtype=jnp.float32)

    # --- reduction='mean' : small tile exercises multi-step accumulator + padding.
    ref_mean = jax.block_until_ready(reference_focal_loss(pred, target, alpha))
    loss = jax.block_until_ready(multiclass_focal_loss(pred, target, alpha, tile_n=128))
    assert jnp.allclose(loss, ref_mean, atol=1e-5, rtol=1e-5), (loss, ref_mean)

    # Default production tile (single grid step, heavy-padding path).
    loss2 = jax.block_until_ready(multiclass_focal_loss(pred, target, alpha))
    assert jnp.allclose(loss2, ref_mean, atol=1e-5, rtol=1e-5), (loss2, ref_mean)

    # --- reduction='sum'
    ref_sum = jax.block_until_ready(reference_focal_loss(pred, target, alpha, reduction="sum"))
    loss_sum = jax.block_until_ready(
        multiclass_focal_loss(pred, target, alpha, reduction="sum", tile_n=128))
    assert jnp.allclose(loss_sum, ref_sum, atol=1e-4, rtol=1e-5), (loss_sum, ref_sum)

    # --- reduction='none' (per-sample losses)
    ref_none = jax.block_until_ready(reference_focal_loss(pred, target, alpha, reduction="none"))
    loss_none = jax.block_until_ready(
        multiclass_focal_loss(pred, target, alpha, reduction="none", tile_n=128))
    assert loss_none.shape == (N,)
    assert jnp.allclose(loss_none, ref_none, atol=1e-5, rtol=1e-5)

    # --- non-default integer gamma (multiply-chain path)
    ref_g3 = jax.block_until_ready(reference_focal_loss(pred, target, alpha, gamma=3))
    loss_g3 = jax.block_until_ready(
        multiclass_focal_loss(pred, target, alpha, gamma=3, tile_n=128))
    assert jnp.allclose(loss_g3, ref_g3, atol=1e-5, rtol=1e-5), (loss_g3, ref_g3)

    print("KERNEL_OK")
</pallas_src>

<mosaic_0001>
module attributes {stable_mosaic.version = 11 : i64} {
  func.func @_focal_loss_sum_kernel(%arg0: i32, %arg1: memref<3x128xf32, #tpu.memory_space<vmem>>, %arg2: memref<1x128xi32, #tpu.memory_space<vmem>>, %arg3: memref<3x1xf32, #tpu.memory_space<vmem>>, %arg4: memref<1xf32, #tpu.memory_space<smem>>, %arg5: memref<1x128xf32, #tpu.memory_space<vmem>>) attributes {dimension_semantics = [#tpu.dimension_semantics<arbitrary>], iteration_bounds = array<i64: 3>, scalar_prefetch = 0 : i64, scratch_operands = 1 : i64, tpu.core_type = #tpu.core_type<tc>, window_params = [{transform_indices = @transform_0, window_bounds = array<i64: 3, 128>}, {transform_indices = @transform_1, window_bounds = array<i64: 1, 128>}, {pipeline_mode = #tpu.pipeline_mode<synchronous>, transform_indices = @transform_2, window_bounds = array<i64: 3, 1>}, {transform_indices = @transform_3, window_bounds = array<i64: 1>}]} {
    %c0_i32 = arith.constant 0 : i32
    %0 = arith.cmpi eq, %arg0, %c0_i32 : i32
    %1 = arith.extui %0 : i1 to i32
    %c0_i32_0 = arith.constant 0 : i32
    %2 = arith.cmpi ne, %1, %c0_i32_0 : i32
    scf.if %2 {
      %cst_18 = arith.constant 0.000000e+00 : f32
      %43 = vector.broadcast %cst_18 : f32 to vector<1x128xf32>
      %c0_19 = arith.constant 0 : index
      %c0_20 = arith.constant 0 : index
      %44 = vector.load %arg5[%c0_19, %c0_20] : memref<1x128xf32, #tpu.memory_space<vmem>>, vector<1x128xf32>
      tpu.vector_store %arg5[%c0_19, %c0_20], %43 {strides = array<i32>} : memref<1x128xf32, #tpu.memory_space<vmem>>, vector<1x128xf32>,
    } else {
    }
    %c0 = arith.constant 0 : index
    %c0_1 = arith.constant 0 : index
    %3 = vector.load %arg5[%c0, %c0_1] : memref<1x128xf32, #tpu.memory_space<vmem>>, vector<1x128xf32>
    %c0_2 = arith.constant 0 : index
    %c0_3 = arith.constant 0 : index
    %4 = vector.load %arg1[%c0_2, %c0_3] : memref<3x128xf32, #tpu.memory_space<vmem>>, vector<3x128xf32>
    %c0_4 = arith.constant 0 : index
    %c0_5 = arith.constant 0 : index
    %5 = vector.load %arg2[%c0_4, %c0_5] : memref<1x128xi32, #tpu.memory_space<vmem>>, vector<1x128xi32>
    %c0_6 = arith.constant 0 : index
    %c0_7 = arith.constant 0 : index
    %6 = vector.load %arg3[%c0_6, %c0_7] : memref<3x1xf32, #tpu.memory_space<vmem>>, vector<3x1xf32>
    %cst = arith.constant dense<0xFF800000> : vector<128xf32>
    %7 = vector.multi_reduction <maximumf>, %4, %cst [0] : vector<3x128xf32> to vector<128xf32>
    %8 = vector.shape_cast %7 : vector<128xf32> to vector<1x128xf32>
    %9 = vector.broadcast %8 : vector<1x128xf32> to vector<3x128xf32>
    %10 = arith.subf %4, %9 : vector<3x128xf32>
    %11 = math.exp %10 : vector<3x128xf32>
    %cst_8 = arith.constant dense<0.000000e+00> : vector<128xf32>
    %12 = vector.multi_reduction <add>, %11, %cst_8 [0] : vector<3x128xf32> to vector<128xf32>
    %13 = vector.shape_cast %12 : vector<128xf32> to vector<1x128xf32>
    %14 = math.log %13 : vector<1x128xf32>
    %15 = vector.broadcast %14 : vector<1x128xf32> to vector<3x128xf32>
    %16 = arith.subf %10, %15 : vector<3x128xf32>
    %17 = tpu.iota {dimensions = array<i32: 0>} : vector<3x128xi32>
    %18 = vector.broadcast %5 : vector<1x128xi32> to vector<3x128xi32>
    %19 = arith.cmpi eq, %17, %18 : vector<3x128xi32>
    %cst_9 = arith.constant 0.000000e+00 : f32
    %20 = vector.broadcast %cst_9 : f32 to vector<3x128xf32>
    %21 = arith.select %19, %16, %20 : vector<3x128xi1>, vector<3x128xf32>
    %cst_10 = arith.constant dense<0.000000e+00> : vector<128xf32>
    %22 = vector.multi_reduction <add>, %21, %cst_10 [0] : vector<3x128xf32> to vector<128xf32>
    %23 = vector.shape_cast %22 : vector<128xf32> to vector<1x128xf32>
    %cst_11 = arith.constant 0.000000e+00 : f32
    %24 = vector.shape_cast %6 : vector<3x1xf32> to vector<3x1xf32>
    %25 = vector.broadcast %24 : vector<3x1xf32> to vector<3x128xf32>
    %26 = vector.broadcast %cst_11 : f32 to vector<3x128xf32>
    %27 = arith.select %19, %25, %26 : vector<3x128xi1>, vector<3x128xf32>
    %cst_12 = arith.constant dense<0.000000e+00> : vector<128xf32>
    %28 = vector.multi_reduction <add>, %27, %cst_12 [0] : vector<3x128xf32> to vector<128xf32>
    %29 = vector.shape_cast %28 : vector<128xf32> to vector<1x128xf32>
    %cst_13 = arith.constant 0.000000e+00 : f32
    %30 = vector.broadcast %cst_13 : f32 to vector<1x128xf32>
    %31 = arith.subf %30, %23 : vector<1x128xf32>
    %32 = math.exp %23 : vector<1x128xf32>
    %cst_14 = arith.constant 1.000000e+00 : f32
    %33 = vector.broadcast %cst_14 : f32 to vector<1x128xf32>
    %34 = arith.subf %33, %32 : vector<1x128xf32>
    %35 = arith.mulf %34, %34 : vector<1x128xf32>
    %36 = arith.mulf %29, %35 : vector<1x128xf32>
    %37 = arith.mulf %36, %31 : vector<1x128xf32>
    %38 = arith.addf %3, %37 : vector<1x128xf32>
    %c0_15 = arith.constant 0 : index
    %c0_16 = arith.constant 0 : index
    %39 = vector.load %arg5[%c0_15, %c0_16] : memref<1x128xf32, #tpu.memory_space<vmem>>, vector<1x128xf32>
    tpu.vector_store %arg5[%c0_15, %c0_16], %38 {strides = array<i32>} : memref<1x128xf32, #tpu.memory_space<vmem>>, vector<1x128xf32>,
    %c2_i32 = arith.constant 2 : i32
    %40 = arith.cmpi eq, %arg0, %c2_i32 : i32
    %41 = arith.extui %40 : i1 to i32
    %c0_i32_17 = arith.constant 0 : i32
    %42 = arith.cmpi ne, %41, %c0_i32_17 : i32
    scf.if %42 {
      %c0_18 = arith.constant 0 : index
      %c0_19 = arith.constant 0 : index
      %43 = vector.load %arg5[%c0_18, %c0_19] : memref<1x128xf32, #tpu.memory_space<vmem>>, vector<1x128xf32>
      %44 = vector.shape_cast %43 : vector<1x128xf32> to vector<1x1x128xf32>
      %cst_20 = arith.constant dense<0.000000e+00> : vector<1xf32>
      %45 = vector.multi_reduction <add>, %44, %cst_20 [1, 2] : vector<1x1x128xf32> to vector<1xf32>
      %46 = vector.shape_cast %45 : vector<1xf32> to vector<1x1x1xf32>
      %47 = vector.extract %46[0, 0, 0] : f32 from vector<1x1x1xf32>
      %c0_21 = arith.constant 0 : index
      %48 = memref.load %arg4[%c0_21] : memref<1xf32, #tpu.memory_space<smem>>
      memref.store %47, %arg4[%c0_21] : memref<1xf32, #tpu.memory_space<smem>>
    } else {
    }
    return
  }
  func.func @transform_0(%arg0: i32) -> (i32, i32) {
    %c0_i32 = arith.constant 0 : i32
    %c0_i32_0 = arith.constant 0 : i32
    return %c0_i32, %arg0 : i32, i32
  }
  func.func @transform_1(%arg0: i32) -> (i32, i32) {
    %c0_i32 = arith.constant 0 : i32
    %c0_i32_0 = arith.constant 0 : i32
    return %c0_i32, %arg0 : i32, i32
  }
  func.func @transform_2(%arg0: i32) -> (i32, i32) {
    %c0_i32 = arith.constant 0 : i32
    %c0_i32_0 = arith.constant 0 : i32
    %c0_i32_1 = arith.constant 0 : i32
    return %c0_i32, %c0_i32_0 : i32, i32
  }
  func.func @transform_3(%arg0: i32) -> i32 {
    %c0_i32 = arith.constant 0 : i32
    %c0_i32_0 = arith.constant 0 : i32
    return %c0_i32 : i32
  }
}

</mosaic_0001>

<llo_original>
// kernel: tpu_custom_call.1
$region0: #{tpu_custom_call.1}
  #allocation0 [shape = 'u32[]', space=smem, size = 0x4, offset = 0x4, fixed_abs, tag = 'smem constant byte address 0x4 - core index']
  #allocation1 [shape = 'u32[144,128]{1,0:T(1,128)}', space=vmem, size = 0x12000, scoped, tag = 'internal scratch']
  #allocation2 [shape = 'f32[1,128]{1,0:T(1,128)}', space=vmem, size = 0x200, scoped, tag = 'scratch operand']
  %s0 = inlined_call_operand.hbm [shape: f32[3,384], index: 0, kind: input, shape index: {}]
  %s1 = inlined_call_operand.vmem [shape: s32[1,384], index: 1, kind: input, shape index: {}]
  %s2 = inlined_call_operand.vmem [shape: f32[3,1], index: 2, kind: input, shape index: {}]
  %s3 = inlined_call_operand.hbm [shape: f32[1], index: 3, kind: output, shape index: {}]
  %s4 = sld [smem:[#allocation0]]
  $region57: #{tpu_custom_call.1} parent=0
    _
  %s6 = ssub.s32 1, %s4
  %s7 = scalar_select 0, %s6, %s4
  $region1: #{tpu_custom_call.1} parent=0
    #allocation3 [shape = 'u8[4096]{0}', space=vmem, size = 0x1000, scoped, tag = 'input window, operand 0']
    #allocation4 [shape = 's32[2]{0}', space=sflag, size = 0x8, scoped, tag = 'scoped memory for tpu_custom_call.1']
    #allocation5 [shape = 's32[2]{0}', space=sflag, size = 0x8, scoped, tag = 'scoped memory for tpu_custom_call.1']
    #allocation6 [shape = 'u8[512]{0}', space=smem, size = 0x200, scoped, tag = 'output window, operand 0, single buffered']
    %8 = vsyncpa [#allocation4], 0
    %s9 = scalar_lea.sflag [#allocation4], 1
    %10 = vsyncpa %s9, 0
    %11 = vsyncpa [#allocation5], 0
    loop: start=0, step=1, limit=5
    $region2: #{tpu_custom_call.1} parent=1 // loop_pre_header
      _
    $region3: #{tpu_custom_call.1} parent=1 // loop_header
      %s13 = sphi 0, %s17
      %p14 = scmp.ge.s32.totalorder %s13, 5
      %s23 = sphi 0, %s25
      %s26 = sphi 0, %s23
      %s27 = sphi 0, %s26
      %s43 = sphi 0, %s27
      %s49 = sphi 0, %s51
      %s52 = sphi 0, %s49
      %s53 = sphi 0, %s52
      %s69 = sphi 0, %s53
      %s73 = sphi 0, %s73
      %s75 = sphi 0, %s73
      %s76 = sphi 0, %s75
      %s90 = sphi 0, %s76
      %s94 = sphi 0, %s94
      %s96 = sphi 0, %s94
      %s97 = sphi 0, %s96
      %s111 = sphi 0, %s97
    $region4: #{tpu_custom_call.1} parent=1 // loop_header_branch
      %16 = sbr.rel (%p14) target = $region8
    $region5: #{tpu_custom_call.1} parent=1 // loop_body
      %s18 = ssub.s32 %s13, 1
      %s19 = ssub.s32 %s13, 2
      %s20 = sadd.s32 %s13, 1
      %s21 = ssub.s32 %s13, %s20
      %p22 = scmp.eq.s32.totalorder %s21, 0
      %s24 = sadd.s32 %s23, 1
      %s25 = scalar_select %p22, %s23, %s24
      %p28 = pneg %p22
      %p29 = scmp.eq.s32.totalorder %s13, 2
      %p30 = por %p28, %p29
      %p31 = scmp.ne.s32.totalorder %s23, %s26
      %p32 = scmp.eq.s32.totalorder %s13, 0
      %p33 = por %p31, %p32
      %p34 = scmp.ne.s32.totalorder %s23, %s26
      %p35 = scmp.eq.s32.totalorder %s18, 2
      %p36 = por %p34, %p35
      %p37 = scmp.ne.s32.totalorder %s26, %s27
      %p38 = scmp.eq.s32.totalorder %s18, 0
      %p39 = por %p37, %p38
      %p40 = scmp.ne.s32.totalorder %s26, %s27
      %p41 = scmp.eq.s32.totalorder %s19, 2
      %p42 = por %p40, %p41
      %p44 = scmp.ne.s32.totalorder %s27, %s43
      %p45 = scmp.eq.s32.totalorder %s19, 0
      %p46 = por %p44, %p45
      %s47 = ssub.s32 %s13, %s20
      %p48 = scmp.eq.s32.totalorder %s47, 0
      %s50 = sadd.s32 %s49, 1
      %s51 = scalar_select %p48, %s49, %s50
      %p54 = pneg %p48
      %p55 = scmp.eq.s32.totalorder %s13, 2
      %p56 = por %p54, %p55
      %p57 = scmp.ne.s32.totalorder %s49, %s52
      %p58 = scmp.eq.s32.totalorder %s13, 0
      %p59 = por %p57, %p58
      %p60 = scmp.ne.s32.totalorder %s49, %s52
      %p61 = scmp.eq.s32.totalorder %s18, 2
      %p62 = por %p60, %p61
      %p63 = scmp.ne.s32.totalorder %s52, %s53
      %p64 = scmp.eq.s32.totalorder %s18, 0
      %p65 = por %p63, %p64
      %p66 = scmp.ne.s32.totalorder %s52, %s53
      %p67 = scmp.eq.s32.totalorder %s19, 2
      %p68 = por %p66, %p67
      %p70 = scmp.ne.s32.totalorder %s53, %s69
      %p71 = scmp.eq.s32.totalorder %s19, 0
      %p72 = por %p70, %p71
      %s74 = sadd.s32 %s73, 1
      %p77 = scmp.eq.s32.totalorder %s13, 2
      %p78 = scmp.ne.s32.totalorder %s73, %s75
      %p79 = scmp.eq.s32.totalorder %s13, 0
      %p80 = por %p78, %p79
      %p81 = scmp.ne.s32.totalorder %s73, %s75
      %p82 = scmp.eq.s32.totalorder %s18, 2
      %p83 = por %p81, %p82
      %p84 = scmp.ne.s32.totalorder %s75, %s76
      %p85 = scmp.eq.s32.totalorder %s18, 0
      %p86 = por %p84, %p85
      %p87 = scmp.ne.s32.totalorder %s75, %s76
      %p88 = scmp.eq.s32.totalorder %s19, 2
      %p89 = por %p87, %p88
      %p91 = scmp.ne.s32.totalorder %s76, %s90
      %p92 = scmp.eq.s32.totalorder %s19, 0
      %p93 = por %p91, %p92
      %s95 = sadd.s32 %s94, 1
      %p98 = scmp.eq.s32.totalorder %s13, 2
      %p99 = scmp.ne.s32.totalorder %s94, %s96
      %p100 = scmp.eq.s32.totalorder %s13, 0
      %p101 = por %p99, %p100
      %p102 = scmp.ne.s32.totalorder %s94, %s96
      %p103 = scmp.eq.s32.totalorder %s18, 2
      %p104 = por %p102, %p103
      %p105 = scmp.ne.s32.totalorder %s96, %s97
      %p106 = scmp.eq.s32.totalorder %s18, 0
      %p107 = por %p105, %p106
      %p108 = scmp.ne.s32.totalorder %s96, %s97
      %p109 = scmp.eq.s32.totalorder %s19, 2
      %p110 = por %p108, %p109
      %p112 = scmp.ne.s32.totalorder %s97, %s111
      %p113 = scmp.eq.s32.totalorder %s19, 0
      %p114 = por %p112, %p113
      %p115 = scmp.le.s32.totalorder 1, %s13
      %p116 = scmp.lt.s32.totalorder %s13, 4
      %p117 = pnand %p115, %p116
      %p118 = pneg %p117
      // Predicated region
      $region9: #{tpu_custom_call.1} parent=5 // pred_check
        _
      $region10: #{tpu_custom_call.1} parent=5 // pred_check_branch
        %120 = sbr.rel (%p117) target = $region12
      $region11: #{tpu_custom_call.1} parent=5 // pred_region
        %s121 = ssub.s32 %s13, 1
        // Predicated region
        $region13: #{tpu_custom_call.1} parent=11 // pred_check
          %p122 = pneg %p86
        $region14: #{tpu_custom_call.1} parent=11 // pred_check_branch
          %124 = sbr.rel (%p122) target = $region16
        $region15: #{tpu_custom_call.1} parent=11 // pred_region
          _
        $region16: #{tpu_custom_call.1} parent=11 // pred_fallthru
          _
      $region12: #{tpu_custom_call.1} parent=5 // pred_fallthru
        _
      %p125 = scmp.lt.s32.totalorder %s13, 3
      // Predicated region
      $region17: #{tpu_custom_call.1} parent=5 // pred_check
        %p126 = pneg %p125
      $region18: #{tpu_custom_call.1} parent=5 // pred_check_branch
        %128 = sbr.rel (%p126) target = $region20
      $region19: #{tpu_custom_call.1} parent=5 // pred_region
        // Predicated region
        $region21: #{tpu_custom_call.1} parent=19 // pred_check
          %p129 = pneg %p33
        $region22: #{tpu_custom_call.1} parent=19 // pred_check_branch
          %131 = sbr.rel (%p129) target = $region24
        $region23: #{tpu_custom_call.1} parent=19 // pred_region
          %s132 = sand.u32 %s23, 1
          %s133 = scalar_lea.sflag [#allocation4], %s132
          %s134 = sand.u32 %s23, 1
          %s135 = smul.addr %s134, 4
          %s136 = scalar_lea.vmem [#allocation3], %s135
          %s138 = ssub.s32 64, 64
          %139 = vsyncadd %s133, %s138
          %s140 = smul.addr %s13, 64
          %s141 = scalar_lea.hbm %s0, %s140
          %s143 = sshll.u32 %s136, 4
          %s144 = int_to_ptr.vmem [resolvable:$true] %s143
          %146 = dma.hbm_to_vmem [thread:$0]  %s141, 64, %s144, %s133
        $region24: #{tpu_custom_call.1} parent=19 // pred_fallthru
          _
        // Predicated region
        $region25: #{tpu_custom_call.1} parent=19 // pred_check
          %p147 = pneg %p59
        $region26: #{tpu_custom_call.1} parent=19 // pred_check_branch
          %149 = sbr.rel (%p147) target = $region28
        $region27: #{tpu_custom_call.1} parent=19 // pred_region
          %p150 = scmp.lt.s32.totalorder %s13, 2
          %s151 = scalar_select %p150, %s13, 2
          %s152 = scalar_lea.vmem %s1, %s151
        $region28: #{tpu_custom_call.1} parent=19 // pred_fallthru
          _
      $region20: #{tpu_custom_call.1} parent=5 // pred_fallthru
        _
      %p153 = scmp.le.s32.totalorder 1, %s13
      %p154 = scmp.lt.s32.totalorder %s13, 4
      %p155 = pnand %p153, %p154
      %p156 = pneg %p155
      // Predicated region
      $region29: #{tpu_custom_call.1} parent=5 // pred_check
        _
      $region30: #{tpu_custom_call.1} parent=5 // pred_check_branch
        %158 = sbr.rel (%p155) target = $region32
      $region31: #{tpu_custom_call.1} parent=5 // pred_region
        %s159 = ssub.s32 %s13, 1
        %s160 = sand.u32 %s26, 1
        %s161 = scalar_lea.sflag [#allocation4], %s160
        %s162 = sand.u32 %s26, 1
        %s163 = smul.addr %s162, 4
        %s164 = scalar_lea.vmem [#allocation3], %s163
        // Predicated region
        $region33: #{tpu_custom_call.1} parent=31 // pred_check
          %p165 = pneg %p39
        $region34: #{tpu_custom_call.1} parent=31 // pred_check_branch
          %167 = sbr.rel (%p165) target = $region36
        $region35: #{tpu_custom_call.1} parent=31 // pred_region
          %168 = dma.done %s161, 64
        $region36: #{tpu_custom_call.1} parent=31 // pred_fallthru
          _
        %s169 = sand.u32 %s26, 1
        %s170 = scalar_lea.sflag [#allocation4], %s169
        %s171 = sand.u32 %s26, 1
        %s172 = smul.addr %s171, 4
        %s173 = scalar_lea.vmem [#allocation3], %s172
        %p174 = pneg %p39
        %p175 = pneg %p36
        %p176 = scmp.lt.s32.totalorder %s18, 2
        %s177 = scalar_select %p176, %s18, 2
        %s178 = scalar_lea.vmem %s1, %s177
        %p179 = pneg %p65
        %p180 = pneg %p62
        %p181 = pneg %p86
        %p182 = pneg %p83
        %p183 = pneg %p107
        %p184 = pneg %p104
        %p185 = scmp.lt.s32.totalorder %s18, 2
        %s186 = scalar_select %p185, %s18, 2
        %s187 = scalar_lea.vmem %s1, %s186
        %p188 = scmp.eq.s32.totalorder %s18, 0
        // Predicated region
        $region37: #{tpu_custom_call.1} parent=31 // pred_check
          %p189 = pneg %p188
        $region38: #{tpu_custom_call.1} parent=31 // pred_check_branch
          %191 = sbr.rel (%p189) target = $region40
        $region39: #{tpu_custom_call.1} parent=31 // pred_region
          %192 = vst [vmem:[#allocation2] sm:$0x1] 0.0
        $region40: #{tpu_custom_call.1} parent=31 // pred_fallthru
          _
        %v193 = vld [vmem:[#allocation2] sm:$0x1]
        %v194 = vld [vmem:[%s164] sm:$0x7]
        %v195 = vld [vmem:[%s187] sm:$0x1]
        %v196 = vld [vmem:[%s2] sm:$0x7]
        %vm197 = vcmask 1042432
        %v198 = vsel %vm197, %v194, -inf
        %v199 = vrot.slane %v198, 4
        %v200 = vmax.f32 %v198, %v199
        %v201 = vrot.slane %v200, 2
        %v202 = vmax.f32 %v200, %v201
        %v203 = vrot.slane %v202, 1
        %v204 = vmax.f32 %v202, %v203
        %v205 = vsub.f32 %v194, %v204
        %v206 = vmul.f32 %v205, 1.442695
        %v207 = vpow.pop %v206
        %v208 = vsel %vm197, %v207, 0.0
        %v209 = vrot.slane %v208, 4
        %v210 = vadd.f32 %v208, %v209
        %v211 = vrot.slane %v210, 2
        %v212 = vadd.f32 %v210, %v211
        %v213 = vrot.slane %v212, 1
        %v214 = vadd.f32 %v212, %v213
        %v215 = vlog2.pop %v214
        %v216 = vmul.f32 %v215, 0.6931472
        %v217 = vsub.f32 %v205, %v216
        %v218 = vlaneseq
        %v219 = vshrl.u32 %v218, 7
        %v220 = vlaneseq
        %v221 = vshrl.u32 %v220, 7
        %v222 = vsub.s32 0, %v221
        %v223 = vrot.slane %v195, %v222
        %vm224 = vcmp.eq.s32.totalorder %v219, %v223
        %v225 = vsel %vm224, %v217, 0.0
        %v226 = vsel %vm197, %v225, 0.0
        %v227 = vrot.slane %v226, 4
        %v228 = vadd.f32 %v226, %v227
        %v229 = vrot.slane %v228, 2
        %v230 = vadd.f32 %v228, %v229
        %v231 = vrot.slane %v230, 1
        %v232 = vadd.f32 %v230, %v231
        %234 = vset.pattern.permute.xlu0 0
        %235 = vperm.xlu0 %234, %v196
        %v236 = vpop.permute.xlu0 %235
        %v238 = vsel %vm224, %v236, 0.0
        %v239 = vsel %vm197, %v238, 0.0
        %v240 = vrot.slane %v239, 4
        %v241 = vadd.f32 %v239, %v240
        %v242 = vrot.slane %v241, 2
        %v243 = vadd.f32 %v241, %v242
        %v244 = vrot.slane %v243, 1
        %v245 = vadd.f32 %v243, %v244
        %v246 = vsub.f32 0.0, %v232
        %v247 = vmul.f32 %v232, 1.442695
        %v248 = vpow.pop %v247
        %v249 = vsub.f32 1.0, %v248
        %v250 = vmul.f32 %v249, %v249
        %v251 = vmul.f32 %v245, %v250
        %v252 = vmul.f32 %v251, %v246
        %v253 = vadd.f32 %v193, %v252
        %254 = vst [vmem:[#allocation2] sm:$0x1] %v253
        %p255 = scmp.eq.s32.totalorder %s18, 2
        // Predicated region
        $region41: #{tpu_custom_call.1} parent=31 // pred_check
          %p256 = pneg %p255
        $region42: #{tpu_custom_call.1} parent=31 // pred_check_branch
          %258 = sbr.rel (%p256) target = $region44
        $region43: #{tpu_custom_call.1} parent=31 // pred_region
          %v259 = vld [vmem:[#allocation2] sm:$0x1]
          %vm260 = vcmask 1040384
          %v261 = vsel %vm260, %v259, 0.0
          %262 = vadd.xlane.f32.xlu0 %v261
          %v263 = vpop.xlane.xlu0 %262
          %v264 = vrot.slane %v263, 4
          %v265 = vadd.f32 %v263, %v264
          %v266 = vrot.slane %v265, 2
          %v267 = vadd.f32 %v265, %v266
          %v268 = vrot.slane %v267, 1
          %v269 = vadd.f32 %v267, %v268
          %s270 = vtos %v269
          %s271 = scalar_lea.smem [#allocation6], 0
          %272 = sst [smem:[%s271]] %s270
        $region44: #{tpu_custom_call.1} parent=31 // pred_fallthru
          _
        // Predicated region
        $region45: #{tpu_custom_call.1} parent=31 // pred_check
          %p273 = pneg %p104
        $region46: #{tpu_custom_call.1} parent=31 // pred_check_branch
          %275 = sbr.rel (%p273) target = $region48
        $region47: #{tpu_custom_call.1} parent=31 // pred_region
          %s277 = ssub.s32 16, 16
          %278 = vsyncadd [#allocation5], %s277
          %281 = dma.smem_to_hbm [#allocation6], 16, %s3, [#allocation5]
        $region48: #{tpu_custom_call.1} parent=31 // pred_fallthru
          _
        // Predicated region
        $region49: #{tpu_custom_call.1} parent=31 // pred_check
          %p282 = pneg %p104
        $region50: #{tpu_custom_call.1} parent=31 // pred_check_branch
          %284 = sbr.rel (%p282) target = $region52
        $region51: #{tpu_custom_call.1} parent=31 // pred_region
          %285 = dma.done [#allocation5], 16
        $region52: #{tpu_custom_call.1} parent=31 // pred_fallthru
          _
        %286 = sfence
      $region32: #{tpu_custom_call.1} parent=5 // pred_fallthru
        _
      %p287 = scmp.le.s32.totalorder 2, %s13
      // Predicated region
      $region53: #{tpu_custom_call.1} parent=5 // pred_check
        %p288 = pneg %p287
      $region54: #{tpu_custom_call.1} parent=5 // pred_check_branch
        %290 = sbr.rel (%p288) target = $region56
      $region55: #{tpu_custom_call.1} parent=5 // pred_region
        %s291 = ssub.s32 %s13, 2
      $region56: #{tpu_custom_call.1} parent=5 // pred_fallthru
        _
    $region6: #{tpu_custom_call.1} parent=1 // loop_footer
      %s17 = sadd.s32 1, %s13
    $region7: #{tpu_custom_call.1} parent=1 // loop_footer_branch
      %12 = sbr.rel target = $region3
    $region8: #{tpu_custom_call.1} parent=1 // loop_exit
      _
    %292 = vsyncpa [#allocation4], 1
    %s293 = scalar_lea.sflag [#allocation4], 1
    %294 = vsyncpa %s293, 1
    %295 = vsyncpa [#allocation5], 1
    %s296 = scalar_lea.sflag [#allocation5], 1
    %297 = vsyncpa %s296, 1

</llo_original>
